<compile_context>
chip_gen: v7x
topology: tpu7x:2x2x1
jax: 0.10.0
libtpu: 0.0.40
codegen_flags: <defaults>
</compile_context>

<pallas_src>
import functools

import jax
import jax.numpy as jnp
from jax.experimental import pallas as pl
from jax.experimental.pallas import tpu as pltpu


def _round_up(x, m):
    return (x + m - 1) // m * m


def _cka_moments_kernel(x1_ref, x2_ref, w1_ref, b1_ref, w2_ref, b2_ref,
                        g_ref, s_ref, *, tb, out_dim, n_valid):
    """Encode one batch tile of both views and emit per-tile CKA moments.

    Emits:
      g_ref : (2*OUT, 2*OUT) gram of zcat = [z1 | z2]  (blocks G11, G12, G22)
      s_ref : (1, 2*OUT)     column sums of zcat        (s1 | s2)
    """
    i = pl.program_id(0)

    # Fused two-view encode: one (2*TB, IN) LHS per tile -> each weight matrix
    # is pushed to the MXU once per tile instead of twice.
    x = jnp.concatenate([x1_ref[...], x2_ref[...]], axis=0)            # (2TB, IN)
    h = jnp.dot(x, w1_ref[...], preferred_element_type=jnp.float32)
    h = jnp.maximum(h + b1_ref[...], 0.0)                              # ReLU
    z = jnp.dot(h, w2_ref[...], preferred_element_type=jnp.float32) + b2_ref[...]

    # Re-stack along the feature axis: zcat = [z1 | z2]   (TB, 2*OUT)
    zcat = jnp.concatenate([z[:tb, :], z[tb:, :]], axis=1)

    # Mask rows of the (possibly ragged) zero-padded last tile.
    row = jax.lax.broadcasted_iota(jnp.int32, (tb, 1), 0) + i * tb
    valid = (row < n_valid).astype(jnp.float32)                        # (TB, 1)
    zcat = zcat * valid

    # Single gram over the batch rows: zcat^T zcat = [[G11, G12], [G12^T, G22]]
    contract_rows = (((0,), (0,)), ((), ()))
    g_ref[...] = jax.lax.dot_general(zcat, zcat, contract_rows,
                                     preferred_element_type=jnp.float32)
    s_ref[...] = jnp.sum(zcat, axis=0, keepdims=True)                  # (1, 2*OUT)


def deep_cka(x1, x2, params, *, block_rows=512, debiased=False):
    """deepCKA.forward: linear CKA between encoded views (debiased=False)."""
    if debiased:
        # TODO(synk): debiased CKA needs the extra diag/row-sum correction terms;
        #             only the module's default debiased=False is implemented.
        raise NotImplementedError("debiased=True not implemented")

    w1, b1, w2, b2 = params
    n, in_dim = x1.shape
    assert x2.shape == x1.shape
    mid = w1.shape[1]
    out_dim = w2.shape[1]

    # Batch tile: multiple of 8 sublanes, capped at block_rows (sized well
    # under every generation's scoped-VMEM budget for these feature dims).
    tb = min(_round_up(n, 8), _round_up(block_rows, 8))
    num_tiles = pl.cdiv(n, tb)
    n_pad = num_tiles * tb
    if n_pad != n:
        x1 = jnp.pad(x1, ((0, n_pad - n), (0, 0)))
        x2 = jnp.pad(x2, ((0, n_pad - n), (0, 0)))

    kernel = functools.partial(_cka_moments_kernel, tb=tb, out_dim=out_dim,
                               n_valid=n)

    x_spec = pl.BlockSpec((tb, in_dim), lambda i: (i, 0))
    w1_spec = pl.BlockSpec((in_dim, mid), lambda i: (0, 0))
    b1_spec = pl.BlockSpec((1, mid), lambda i: (0, 0))
    w2_spec = pl.BlockSpec((mid, out_dim), lambda i: (0, 0))
    b2_spec = pl.BlockSpec((1, out_dim), lambda i: (0, 0))
    g_spec = pl.BlockSpec((None, 2 * out_dim, 2 * out_dim), lambda i: (i, 0, 0))
    s_spec = pl.BlockSpec((None, 1, 2 * out_dim), lambda i: (i, 0, 0))

    g_shape = jax.ShapeDtypeStruct((num_tiles, 2 * out_dim, 2 * out_dim),
                                   jnp.float32)
    s_shape = jax.ShapeDtypeStruct((num_tiles, 1, 2 * out_dim), jnp.float32)

    flops = int(4 * n_pad * (in_dim * mid + mid * out_dim)      # fused encode
                + 8 * n_pad * out_dim * out_dim)                # (2*OUT)^2 gram
    bytes_accessed = int(4 * (2 * n_pad * in_dim
                              + w1.size + b1.size + w2.size + b2.size
                              + num_tiles * (4 * out_dim * out_dim
                                             + 2 * out_dim)))

    g_tiles, s_tiles = pl.pallas_call(
        kernel,
        grid=(num_tiles,),
        in_specs=[x_spec, x_spec, w1_spec, b1_spec, w2_spec, b2_spec],
        out_specs=(g_spec, s_spec),
        out_shape=(g_shape, s_shape),
        compiler_params=pltpu.CompilerParams(
            dimension_semantics=("parallel",),        # megacore split on v7x
            vmem_limit_bytes=32 * 1024 * 1024,
        ),
        cost_estimate=pl.CostEstimate(
            flops=flops, transcendentals=0, bytes_accessed=bytes_accessed),
    )(x1, x2, w1, b1, w2, b2)

    # Tiny O(OUT^2) epilogue in plain JAX from the summed moments (keeps the
    # batch grid axis "parallel" instead of a serial cross-grid accumulator).
    g = jnp.sum(g_tiles, axis=0)                     # (2*OUT, 2*OUT)
    s = jnp.sum(s_tiles, axis=0)                     # (1, 2*OUT)

    g11 = g[:out_dim, :out_dim]
    g12 = g[:out_dim, out_dim:]
    g22 = g[out_dim:, out_dim:]
    s1 = s[:, :out_dim]                              # (1, OUT) column sums of z1
    s2 = s[:, out_dim:]

    inv_n = 1.0 / jnp.float32(n)
    c12 = g12 - (s1.T @ s2) * inv_n                  # = F1^T F2 with centered features
    c11 = g11 - (s1.T @ s1) * inv_n
    c22 = g22 - (s2.T @ s2) * inv_n

    num = jnp.sum(c12 * c12)                         # ||F1^T F2||_F^2
    nx = jnp.sqrt(jnp.sum(c11 * c11))                # ||F1^T F1||_F
    ny = jnp.sqrt(jnp.sum(c22 * c22))                # ||F2^T F2||_F
    return num / (nx * ny)


def init_params(key, in_dim, mid_layers, out_dim):
    """Deterministic PyTorch-style Linear init: U(-1/sqrt(fan_in), 1/sqrt(fan_in))."""
    k1, k2, k3, k4 = jax.random.split(key, 4)
    lim1 = 1.0 / jnp.sqrt(jnp.float32(in_dim))
    lim2 = 1.0 / jnp.sqrt(jnp.float32(mid_layers))
    w1 = jax.random.uniform(k1, (in_dim, mid_layers), jnp.float32, -lim1, lim1)
    b1 = jax.random.uniform(k2, (1, mid_layers), jnp.float32, -lim1, lim1)
    w2 = jax.random.uniform(k3, (mid_layers, out_dim), jnp.float32, -lim2, lim2)
    b2 = jax.random.uniform(k4, (1, out_dim), jnp.float32, -lim2, lim2)
    return w1, b1, w2, b2


def reference(x1, x2, params):
    """Pure-JAX deepCKA.forward: encoder + feature-space linear CKA."""
    w1, b1, w2, b2 = params

    def enc(x):
        h = jnp.maximum(x @ w1 + b1, 0.0)
        return h @ w2 + b2

    f1, f2 = enc(x1), enc(x2)
    f1 = f1 - jnp.mean(f1, axis=0, keepdims=True)
    f2 = f2 - jnp.mean(f2, axis=0, keepdims=True)
    num = jnp.linalg.norm(f1.T @ f2) ** 2
    nx = jnp.linalg.norm(f1.T @ f1)
    ny = jnp.linalg.norm(f2.T @ f2)
    return num / (nx * ny)


if __name__ == "__main__":
    # Ragged batch (50 not a multiple of the 16-row tile) exercises the
    # multi-tile grid and the padded-row masking.
    B, IN_DIM, MID, OUT_DIM = 50, 32, 64, 16

    key = jax.random.PRNGKey(0)
    kx1, kx2, kp = jax.random.split(key, 3)
    x1 = jax.random.normal(kx1, (B, IN_DIM), jnp.float32)
    x2 = jax.random.normal(kx2, (B, IN_DIM), jnp.float32)
    params = init_params(kp, IN_DIM, MID, OUT_DIM)

    fn = jax.jit(functools.partial(deep_cka, block_rows=16))  # 4 tiles, ragged last
    out = jax.block_until_ready(fn(x1, x2, params))

    ref = reference(x1, x2, params)
    assert jnp.allclose(out, ref, atol=1e-4, rtol=1e-4), (out, ref)

    print("KERNEL_OK")
</pallas_src>

<mosaic_0001>
module attributes {stable_mosaic.version = 11 : i64} {
  func.func @_cka_moments_kernel(%arg0: i32, %arg1: memref<16x32xf32, #tpu.memory_space<vmem>>, %arg2: memref<16x32xf32, #tpu.memory_space<vmem>>, %arg3: memref<32x64xf32, #tpu.memory_space<vmem>>, %arg4: memref<1x64xf32, #tpu.memory_space<vmem>>, %arg5: memref<64x16xf32, #tpu.memory_space<vmem>>, %arg6: memref<1x16xf32, #tpu.memory_space<vmem>>, %arg7: memref<1x32x32xf32, #tpu.memory_space<vmem>>, %arg8: memref<1x1x32xf32, #tpu.memory_space<vmem>>) attributes {dimension_semantics = [#tpu.dimension_semantics<parallel>], iteration_bounds = array<i64: 4>, scalar_prefetch = 0 : i64, scratch_operands = 0 : i64, tpu.core_type = #tpu.core_type<tc>, window_params = [{transform_indices = @transform_0, window_bounds = array<i64: 16, 32>}, {transform_indices = @transform_1, window_bounds = array<i64: 16, 32>}, {pipeline_mode = #tpu.pipeline_mode<synchronous>, transform_indices = @transform_2, window_bounds = array<i64: 32, 64>}, {pipeline_mode = #tpu.pipeline_mode<synchronous>, transform_indices = @transform_3, window_bounds = array<i64: 1, 64>}, {pipeline_mode = #tpu.pipeline_mode<synchronous>, transform_indices = @transform_4, window_bounds = array<i64: 64, 16>}, {pipeline_mode = #tpu.pipeline_mode<synchronous>, transform_indices = @transform_5, window_bounds = array<i64: 1, 16>}, {transform_indices = @transform_6, window_bounds = array<i64: 1, 32, 32>}, {transform_indices = @transform_7, window_bounds = array<i64: 1, 1, 32>}]} {
    %c0 = arith.constant 0 : index
    %c0_0 = arith.constant 0 : index
    %0 = vector.load %arg1[%c0, %c0_0] : memref<16x32xf32, #tpu.memory_space<vmem>>, vector<16x32xf32>
    %c0_1 = arith.constant 0 : index
    %c0_2 = arith.constant 0 : index
    %1 = vector.load %arg2[%c0_1, %c0_2] : memref<16x32xf32, #tpu.memory_space<vmem>>, vector<16x32xf32>
    %2 = tpu.concatenate %0, %1 in 0 : vector<16x32xf32>, vector<16x32xf32> -> vector<32x32xf32>
    %c0_3 = arith.constant 0 : index
    %c0_4 = arith.constant 0 : index
    %3 = vector.load %arg3[%c0_3, %c0_4] : memref<32x64xf32, #tpu.memory_space<vmem>>, vector<32x64xf32>
    %cst = arith.constant dense<0.000000e+00> : vector<32x64xf32>
    %4 = tpu.matmul %2, %3, %cst {dimension_numbers = #tpu.dot_dimension_numbers<[1], [0], [0], [1], [0, 0, 1, 1], [], []>} : vector<32x32xf32>, vector<32x64xf32>, vector<32x64xf32> -> vector<32x64xf32>
    %c0_5 = arith.constant 0 : index
    %c0_6 = arith.constant 0 : index
    %5 = vector.load %arg4[%c0_5, %c0_6] : memref<1x64xf32, #tpu.memory_space<vmem>>, vector<1x64xf32>
    %6 = vector.broadcast %5 : vector<1x64xf32> to vector<32x64xf32>
    %7 = arith.addf %4, %6 : vector<32x64xf32>
    %cst_7 = arith.constant 0.000000e+00 : f32
    %8 = vector.broadcast %cst_7 : f32 to vector<32x64xf32>
    %9 = arith.maximumf %7, %8 : vector<32x64xf32>
    %c0_8 = arith.constant 0 : index
    %c0_9 = arith.constant 0 : index
    %10 = vector.load %arg5[%c0_8, %c0_9] : memref<64x16xf32, #tpu.memory_space<vmem>>, vector<64x16xf32>
    %cst_10 = arith.constant dense<0.000000e+00> : vector<32x16xf32>
    %11 = tpu.matmul %9, %10, %cst_10 {dimension_numbers = #tpu.dot_dimension_numbers<[1], [0], [0], [1], [0, 0, 1, 1], [], []>} : vector<32x64xf32>, vector<64x16xf32>, vector<32x16xf32> -> vector<32x16xf32>
    %c0_11 = arith.constant 0 : index
    %c0_12 = arith.constant 0 : index
    %12 = vector.load %arg6[%c0_11, %c0_12] : memref<1x16xf32, #tpu.memory_space<vmem>>, vector<1x16xf32>
    %13 = vector.broadcast %12 : vector<1x16xf32> to vector<32x16xf32>
    %14 = arith.addf %11, %13 : vector<32x16xf32>
    %15 = vector.extract_strided_slice %14 {offsets = [0, 0], sizes = [16, 16], strides = [1, 1]} : vector<32x16xf32> to vector<16x16xf32>
    %16 = vector.extract_strided_slice %14 {offsets = [16, 0], sizes = [16, 16], strides = [1, 1]} : vector<32x16xf32> to vector<16x16xf32>
    %17 = tpu.concatenate %15, %16 in 1 : vector<16x16xf32>, vector<16x16xf32> -> vector<16x32xf32>
    %18 = tpu.iota {dimensions = array<i32: 0>} : vector<16x1xi32>
    %c16_i32 = arith.constant 16 : i32
    %19 = arith.muli %arg0, %c16_i32 : i32
    %20 = vector.broadcast %19 : i32 to vector<16x1xi32>
    %21 = arith.addi %18, %20 : vector<16x1xi32>
    %c50_i32 = arith.constant 50 : i32
    %22 = vector.broadcast %c50_i32 : i32 to vector<16x1xi32>
    %23 = arith.cmpi slt, %21, %22 : vector<16x1xi32>
    %24 = arith.extui %23 : vector<16x1xi1> to vector<16x1xi32>
    %25 = arith.sitofp %24 : vector<16x1xi32> to vector<16x1xf32>
    %26 = vector.broadcast %25 : vector<16x1xf32> to vector<16x32xf32>
    %27 = arith.mulf %17, %26 : vector<16x32xf32>
    %cst_13 = arith.constant dense<0.000000e+00> : vector<32x32xf32>
    %28 = tpu.matmul %27, %27, %cst_13 {dimension_numbers = #tpu.dot_dimension_numbers<[0], [0], [1], [1], [0, 1, 1, 1], [], []>} : vector<16x32xf32>, vector<16x32xf32>, vector<32x32xf32> -> vector<32x32xf32>
    %c0_14 = arith.constant 0 : index
    %c0_15 = arith.constant 0 : index
    %c0_16 = arith.constant 0 : index
    %29 = vector.load %arg7[%c0_14, %c0_15, %c0_16] : memref<1x32x32xf32, #tpu.memory_space<vmem>>, vector<1x32x32xf32>
    %30 = vector.shape_cast %29 : vector<1x32x32xf32> to vector<32x32xf32>
    %31 = vector.shape_cast %28 : vector<32x32xf32> to vector<1x32x32xf32>
    tpu.vector_store %arg7[%c0_14, %c0_15, %c0_16], %31 {strides = array<i32>} : memref<1x32x32xf32, #tpu.memory_space<vmem>>, vector<1x32x32xf32>,
    %cst_17 = arith.constant dense<0.000000e+00> : vector<32xf32>
    %32 = vector.multi_reduction <add>, %27, %cst_17 [0] : vector<16x32xf32> to vector<32xf32>
    %33 = vector.shape_cast %32 : vector<32xf32> to vector<1x32xf32>
    %c0_18 = arith.constant 0 : index
    %c0_19 = arith.constant 0 : index
    %c0_20 = arith.constant 0 : index
    %34 = vector.load %arg8[%c0_18, %c0_19, %c0_20] : memref<1x1x32xf32, #tpu.memory_space<vmem>>, vector<1x1x32xf32>
    %35 = vector.shape_cast %34 : vector<1x1x32xf32> to vector<1x32xf32>
    %36 = vector.shape_cast %33 : vector<1x32xf32> to vector<1x1x32xf32>
    tpu.vector_store %arg8[%c0_18, %c0_19, %c0_20], %36 {strides = array<i32>} : memref<1x1x32xf32, #tpu.memory_space<vmem>>, vector<1x1x32xf32>,
    return
  }
  func.func @transform_0(%arg0: i32) -> (i32, i32) {
    %c0_i32 = arith.constant 0 : i32
    %c0_i32_0 = arith.constant 0 : i32
    return %arg0, %c0_i32 : i32, i32
  }
  func.func @transform_1(%arg0: i32) -> (i32, i32) {
    %c0_i32 = arith.constant 0 : i32
    %c0_i32_0 = arith.constant 0 : i32
    return %arg0, %c0_i32 : i32, i32
  }
  func.func @transform_2(%arg0: i32) -> (i32, i32) {
    %c0_i32 = arith.constant 0 : i32
    %c0_i32_0 = arith.constant 0 : i32
    %c0_i32_1 = arith.constant 0 : i32
    return %c0_i32, %c0_i32_0 : i32, i32
  }
  func.func @transform_3(%arg0: i32) -> (i32, i32) {
    %c0_i32 = arith.constant 0 : i32
    %c0_i32_0 = arith.constant 0 : i32
    %c0_i32_1 = arith.constant 0 : i32
    return %c0_i32, %c0_i32_0 : i32, i32
  }
  func.func @transform_4(%arg0: i32) -> (i32, i32) {
    %c0_i32 = arith.constant 0 : i32
    %c0_i32_0 = arith.constant 0 : i32
    %c0_i32_1 = arith.constant 0 : i32
    return %c0_i32, %c0_i32_0 : i32, i32
  }
  func.func @transform_5(%arg0: i32) -> (i32, i32) {
    %c0_i32 = arith.constant 0 : i32
    %c0_i32_0 = arith.constant 0 : i32
    %c0_i32_1 = arith.constant 0 : i32
    return %c0_i32, %c0_i32_0 : i32, i32
  }
  func.func @transform_6(%arg0: i32) -> (i32, i32, i32) {
    %c0_i32 = arith.constant 0 : i32
    %c0_i32_0 = arith.constant 0 : i32
    %c0_i32_1 = arith.constant 0 : i32
    return %arg0, %c0_i32, %c0_i32_0 : i32, i32, i32
  }
  func.func @transform_7(%arg0: i32) -> (i32, i32, i32) {
    %c0_i32 = arith.constant 0 : i32
    %c0_i32_0 = arith.constant 0 : i32
    %c0_i32_1 = arith.constant 0 : i32
    return %arg0, %c0_i32, %c0_i32_0 : i32, i32, i32
  }
}

</mosaic_0001>

<llo_original>
// kernel: deep_cka.1
$region0: #{deep_cka.1}
  #allocation0 [shape = 'u32[]', space=smem, size = 0x4, offset = 0x4, fixed_abs, tag = 'smem constant byte address 0x4 - core index']
  #allocation1 [shape = 'u32[144,128]{1,0:T(1,128)}', space=vmem, size = 0x12000, scoped, tag = 'internal scratch']
  %s0 = inlined_call_operand.vmem [shape: f32[64,32], index: 0, kind: input, shape index: {}]
  %s1 = inlined_call_operand.vmem [shape: f32[64,32], index: 1, kind: input, shape index: {}]
  %s2 = inlined_call_operand.vmem [shape: f32[32,64], index: 2, kind: input, shape index: {}]
  %s3 = inlined_call_operand.vmem [shape: f32[1,64], index: 3, kind: input, shape index: {}]
  %s4 = inlined_call_operand.vmem [shape: f32[64,16], index: 4, kind: input, shape index: {}]
  %s5 = inlined_call_operand.vmem [shape: f32[1,16], index: 5, kind: input, shape index: {}]
  %s6 = inlined_call_operand.vmem [shape: f32[4,32,32], index: 6, kind: output, shape index: {0}]
  %s7 = inlined_call_operand.vmem [shape: f32[4,1,32], index: 7, kind: output, shape index: {1}]
  %8 = xla_tuple %s6, %s7
  %s9 = sld [smem:[#allocation0]]
  $region65: #{deep_cka.1} parent=0
    _
  %s11 = ssub.s32 1, %s9
  %s12 = scalar_select 0, %s11, %s9
  loop: start=0, step=1, limit=6
  $region2: #{deep_cka.1} parent=0 // loop_pre_header
    _
  $region3: #{deep_cka.1} parent=0 // loop_header
    %s14 = sphi 0, %s18
    %p15 = scmp.ge.s32.totalorder %s14, 6
    %s24 = sphi 0, %s26
    %s27 = sphi 0, %s24
    %s28 = sphi 0, %s27
    %s44 = sphi 0, %s28
    %s50 = sphi 0, %s52
    %s53 = sphi 0, %s50
    %s54 = sphi 0, %s53
    %s70 = sphi 0, %s54
    %s74 = sphi 0, %s74
    %s76 = sphi 0, %s74
    %s77 = sphi 0, %s76
    %s91 = sphi 0, %s77
    %s95 = sphi 0, %s95
    %s97 = sphi 0, %s95
    %s98 = sphi 0, %s97
    %s112 = sphi 0, %s98
    %s116 = sphi 0, %s116
    %s118 = sphi 0, %s116
    %s119 = sphi 0, %s118
    %s133 = sphi 0, %s119
    %s137 = sphi 0, %s137
    %s139 = sphi 0, %s137
    %s140 = sphi 0, %s139
    %s154 = sphi 0, %s140
    %s160 = sphi 0, %s162
    %s163 = sphi 0, %s160
    %s164 = sphi 0, %s163
    %s180 = sphi 0, %s164
    %s186 = sphi 0, %s188
    %s189 = sphi 0, %s186
    %s190 = sphi 0, %s189
    %s206 = sphi 0, %s190
  $region4: #{deep_cka.1} parent=0 // loop_header_branch
    %17 = sbr.rel (%p15) target = $region8
  $region5: #{deep_cka.1} parent=0 // loop_body
    %s19 = ssub.s32 %s14, 1
    %s20 = ssub.s32 %s14, 2
    %s21 = sadd.s32 %s14, 1
    %s22 = ssub.s32 %s14, %s21
    %p23 = scmp.eq.s32.totalorder %s22, 0
    %s25 = sadd.s32 %s24, 1
    %s26 = scalar_select %p23, %s24, %s25
    %p29 = pneg %p23
    %p30 = scmp.eq.s32.totalorder %s14, 3
    %p31 = por %p29, %p30
    %p32 = scmp.ne.s32.totalorder %s24, %s27
    %p33 = scmp.eq.s32.totalorder %s14, 0
    %p34 = por %p32, %p33
    %p35 = scmp.ne.s32.totalorder %s24, %s27
    %p36 = scmp.eq.s32.totalorder %s19, 3
    %p37 = por %p35, %p36
    %p38 = scmp.ne.s32.totalorder %s27, %s28
    %p39 = scmp.eq.s32.totalorder %s19, 0
    %p40 = por %p38, %p39
    %p41 = scmp.ne.s32.totalorder %s27, %s28
    %p42 = scmp.eq.s32.totalorder %s20, 3
    %p43 = por %p41, %p42
    %p45 = scmp.ne.s32.totalorder %s28, %s44
    %p46 = scmp.eq.s32.totalorder %s20, 0
    %p47 = por %p45, %p46
    %s48 = ssub.s32 %s14, %s21
    %p49 = scmp.eq.s32.totalorder %s48, 0
    %s51 = sadd.s32 %s50, 1
    %s52 = scalar_select %p49, %s50, %s51
    %p55 = pneg %p49
    %p56 = scmp.eq.s32.totalorder %s14, 3
    %p57 = por %p55, %p56
    %p58 = scmp.ne.s32.totalorder %s50, %s53
    %p59 = scmp.eq.s32.totalorder %s14, 0
    %p60 = por %p58, %p59
    %p61 = scmp.ne.s32.totalorder %s50, %s53
    %p62 = scmp.eq.s32.totalorder %s19, 3
    %p63 = por %p61, %p62
    %p64 = scmp.ne.s32.totalorder %s53, %s54
    %p65 = scmp.eq.s32.totalorder %s19, 0
    %p66 = por %p64, %p65
    %p67 = scmp.ne.s32.totalorder %s53, %s54
    %p68 = scmp.eq.s32.totalorder %s20, 3
    %p69 = por %p67, %p68
    %p71 = scmp.ne.s32.totalorder %s54, %s70
    %p72 = scmp.eq.s32.totalorder %s20, 0
    %p73 = por %p71, %p72
    %s75 = sadd.s32 %s74, 1
    %p78 = scmp.eq.s32.totalorder %s14, 3
    %p79 = scmp.ne.s32.totalorder %s74, %s76
    %p80 = scmp.eq.s32.totalorder %s14, 0
    %p81 = por %p79, %p80
    %p82 = scmp.ne.s32.totalorder %s74, %s76
    %p83 = scmp.eq.s32.totalorder %s19, 3
    %p84 = por %p82, %p83
    %p85 = scmp.ne.s32.totalorder %s76, %s77
    %p86 = scmp.eq.s32.totalorder %s19, 0
    %p87 = por %p85, %p86
    %p88 = scmp.ne.s32.totalorder %s76, %s77
    %p89 = scmp.eq.s32.totalorder %s20, 3
    %p90 = por %p88, %p89
    %p92 = scmp.ne.s32.totalorder %s77, %s91
    %p93 = scmp.eq.s32.totalorder %s20, 0
    %p94 = por %p92, %p93
    %s96 = sadd.s32 %s95, 1
    %p99 = scmp.eq.s32.totalorder %s14, 3
    %p100 = scmp.ne.s32.totalorder %s95, %s97
    %p101 = scmp.eq.s32.totalorder %s14, 0
    %p102 = por %p100, %p101
    %p103 = scmp.ne.s32.totalorder %s95, %s97
    %p104 = scmp.eq.s32.totalorder %s19, 3
    %p105 = por %p103, %p104
    %p106 = scmp.ne.s32.totalorder %s97, %s98
    %p107 = scmp.eq.s32.totalorder %s19, 0
    %p108 = por %p106, %p107
    %p109 = scmp.ne.s32.totalorder %s97, %s98
    %p110 = scmp.eq.s32.totalorder %s20, 3
    %p111 = por %p109, %p110
    %p113 = scmp.ne.s32.totalorder %s98, %s112
    %p114 = scmp.eq.s32.totalorder %s20, 0
    %p115 = por %p113, %p114
    %s117 = sadd.s32 %s116, 1
    %p120 = scmp.eq.s32.totalorder %s14, 3
    %p121 = scmp.ne.s32.totalorder %s116, %s118
    %p122 = scmp.eq.s32.totalorder %s14, 0
    %p123 = por %p121, %p122
    %p124 = scmp.ne.s32.totalorder %s116, %s118
    %p125 = scmp.eq.s32.totalorder %s19, 3
    %p126 = por %p124, %p125
    %p127 = scmp.ne.s32.totalorder %s118, %s119
    %p128 = scmp.eq.s32.totalorder %s19, 0
    %p129 = por %p127, %p128
    %p130 = scmp.ne.s32.totalorder %s118, %s119
    %p131 = scmp.eq.s32.totalorder %s20, 3
    %p132 = por %p130, %p131
    %p134 = scmp.ne.s32.totalorder %s119, %s133
    %p135 = scmp.eq.s32.totalorder %s20, 0
    %p136 = por %p134, %p135
    %s138 = sadd.s32 %s137, 1
    %p141 = scmp.eq.s32.totalorder %s14, 3
    %p142 = scmp.ne.s32.totalorder %s137, %s139
    %p143 = scmp.eq.s32.totalorder %s14, 0
    %p144 = por %p142, %p143
    %p145 = scmp.ne.s32.totalorder %s137, %s139
    %p146 = scmp.eq.s32.totalorder %s19, 3
    %p147 = por %p145, %p146
    %p148 = scmp.ne.s32.totalorder %s139, %s140
    %p149 = scmp.eq.s32.totalorder %s19, 0
    %p150 = por %p148, %p149
    %p151 = scmp.ne.s32.totalorder %s139, %s140
    %p152 = scmp.eq.s32.totalorder %s20, 3
    %p153 = por %p151, %p152
    %p155 = scmp.ne.s32.totalorder %s140, %s154
    %p156 = scmp.eq.s32.totalorder %s20, 0
    %p157 = por %p155, %p156
    %s158 = ssub.s32 %s14, %s21
    %p159 = scmp.eq.s32.totalorder %s158, 0
    %s161 = sadd.s32 %s160, 1
    %s162 = scalar_select %p159, %s160, %s161
    %p165 = pneg %p159
    %p166 = scmp.eq.s32.totalorder %s14, 3
    %p167 = por %p165, %p166
    %p168 = scmp.ne.s32.totalorder %s160, %s163
    %p169 = scmp.eq.s32.totalorder %s14, 0
    %p170 = por %p168, %p169
    %p171 = scmp.ne.s32.totalorder %s160, %s163
    %p172 = scmp.eq.s32.totalorder %s19, 3
    %p173 = por %p171, %p172
    %p174 = scmp.ne.s32.totalorder %s163, %s164
    %p175 = scmp.eq.s32.totalorder %s19, 0
    %p176 = por %p174, %p175
    %p177 = scmp.ne.s32.totalorder %s163, %s164
    %p178 = scmp.eq.s32.totalorder %s20, 3
    %p179 = por %p177, %p178
    %p181 = scmp.ne.s32.totalorder %s164, %s180
    %p182 = scmp.eq.s32.totalorder %s20, 0
    %p183 = por %p181, %p182
    %s184 = ssub.s32 %s14, %s21
    %p185 = scmp.eq.s32.totalorder %s184, 0
    %s187 = sadd.s32 %s186, 1
    %s188 = scalar_select %p185, %s186, %s187
    %p191 = pneg %p185
    %p192 = scmp.eq.s32.totalorder %s14, 3
    %p193 = por %p191, %p192
    %p194 = scmp.ne.s32.totalorder %s186, %s189
    %p195 = scmp.eq.s32.totalorder %s14, 0
    %p196 = por %p194, %p195
    %p197 = scmp.ne.s32.totalorder %s186, %s189
    %p198 = scmp.eq.s32.totalorder %s19, 3
    %p199 = por %p197, %p198
    %p200 = scmp.ne.s32.totalorder %s189, %s190
    %p201 = scmp.eq.s32.totalorder %s19, 0
    %p202 = por %p200, %p201
    %p203 = scmp.ne.s32.totalorder %s189, %s190
    %p204 = scmp.eq.s32.totalorder %s20, 3
    %p205 = por %p203, %p204
    %p207 = scmp.ne.s32.totalorder %s190, %s206
    %p208 = scmp.eq.s32.totalorder %s20, 0
    %p209 = por %p207, %p208
    %p210 = scmp.le.s32.totalorder 1, %s14
    %p211 = scmp.lt.s32.totalorder %s14, 5
    %p212 = pnand %p210, %p211
    %p213 = pneg %p212
    // Predicated region
    $region9: #{deep_cka.1} parent=5 // pred_check
      _
    $region10: #{deep_cka.1} parent=5 // pred_check_branch
      %215 = sbr.rel (%p212) target = $region12
    $region11: #{deep_cka.1} parent=5 // pred_region
      %s216 = ssub.s32 %s14, 1
      // Predicated region
      $region13: #{deep_cka.1} parent=11 // pred_check
        %p217 = pneg %p87
      $region14: #{deep_cka.1} parent=11 // pred_check_branch
        %219 = sbr.rel (%p217) target = $region16
      $region15: #{deep_cka.1} parent=11 // pred_region
        _
      $region16: #{deep_cka.1} parent=11 // pred_fallthru
        _
      // Predicated region
      $region17: #{deep_cka.1} parent=11 // pred_check
        %p220 = pneg %p108
      $region18: #{deep_cka.1} parent=11 // pred_check_branch
        %222 = sbr.rel (%p220) target = $region20
      $region19: #{deep_cka.1} parent=11 // pred_region
        _
      $region20: #{deep_cka.1} parent=11 // pred_fallthru
        _
      // Predicated region
      $region21: #{deep_cka.1} parent=11 // pred_check
        %p223 = pneg %p129
      $region22: #{deep_cka.1} parent=11 // pred_check_branch
        %225 = sbr.rel (%p223) target = $region24
      $region23: #{deep_cka.1} parent=11 // pred_region
        _
      $region24: #{deep_cka.1} parent=11 // pred_fallthru
        _
      // Predicated region
      $region25: #{deep_cka.1} parent=11 // pred_check
        %p226 = pneg %p150
      $region26: #{deep_cka.1} parent=11 // pred_check_branch
        %228 = sbr.rel (%p226) target = $region28
      $region27: #{deep_cka.1} parent=11 // pred_region
        _
      $region28: #{deep_cka.1} parent=11 // pred_fallthru
        _
    $region12: #{deep_cka.1} parent=5 // pred_fallthru
      _
    %p229 = scmp.lt.s32.totalorder %s14, 4
    // Predicated region
    $region29: #{deep_cka.1} parent=5 // pred_check
      %p230 = pneg %p229
    $region30: #{deep_cka.1} parent=5 // pred_check_branch
      %232 = sbr.rel (%p230) target = $region32
    $region31: #{deep_cka.1} parent=5 // pred_region
      // Predicated region
      $region33: #{deep_cka.1} parent=31 // pred_check
        %p233 = pneg %p34
      $region34: #{deep_cka.1} parent=31 // pred_check_branch
        %235 = sbr.rel (%p233) target = $region36
      $region35: #{deep_cka.1} parent=31 // pred_region
        %s236 = smul.u32 2, %s14
        %p237 = scmp.lt.s32.totalorder %s236, 7
        %s238 = scalar_select %p237, %s236, 7
        %s239 = smul.addr %s238, 8
        %s240 = scalar_lea.vmem %s0, %s239
        %s241 = smul.u32 2, %s14
      $region36: #{deep_cka.1} parent=31 // pred_fallthru
        _
      // Predicated region
      $region37: #{deep_cka.1} parent=31 // pred_check
        %p242 = pneg %p60
      $region38: #{deep_cka.1} parent=31 // pred_check_branch
        %244 = sbr.rel (%p242) target = $region40
      $region39: #{deep_cka.1} parent=31 // pred_region
        %s245 = smul.u32 2, %s14
        %p246 = scmp.lt.s32.totalorder %s245, 7
        %s247 = scalar_select %p246, %s245, 7
        %s248 = smul.addr %s247, 8
        %s249 = scalar_lea.vmem %s1, %s248
        %s250 = smul.u32 2, %s14
      $region40: #{deep_cka.1} parent=31 // pred_fallthru
        _
    $region32: #{deep_cka.1} parent=5 // pred_fallthru
      _
    %p251 = scmp.le.s32.totalorder 1, %s14
    %p252 = scmp.lt.s32.totalorder %s14, 5
    %p253 = pnand %p251, %p252
    %p254 = pneg %p253
    // Predicated region
    $region41: #{deep_cka.1} parent=5 // pred_check
      _
    $region42: #{deep_cka.1} parent=5 // pred_check_branch
      %256 = sbr.rel (%p253) target = $region44
    $region43: #{deep_cka.1} parent=5 // pred_region
      %s257 = ssub.s32 %s14, 1
      %s258 = smul.u32 2, %s19
      %p259 = scmp.lt.s32.totalorder %s258, 7
      %s260 = scalar_select %p259, %s258, 7
      %s261 = smul.addr %s260, 8
      %s262 = scalar_lea.vmem %s0, %s261
      %p263 = pneg %p40
      %p264 = pneg %p37
      %s265 = smul.u32 2, %s19
      %p266 = scmp.lt.s32.totalorder %s265, 7
      %s267 = scalar_select %p266, %s265, 7
      %s268 = smul.addr %s267, 8
      %s269 = scalar_lea.vmem %s1, %s268
      %p270 = pneg %p66
      %p271 = pneg %p63
      %p272 = pneg %p87
      %p273 = pneg %p84
      %p274 = pneg %p108
      %p275 = pneg %p105
      %p276 = pneg %p129
      %p277 = pneg %p126
      %p278 = pneg %p150
      %p279 = pneg %p147
      %p280 = pneg %p176
      %p281 = pneg %p173
      %p282 = scmp.lt.s32.totalorder %s19, 3
      %s283 = scalar_select %p282, %s19, 3
      %s284 = smul.addr %s283, 4
      %s285 = smul.addr %s284, 8
      %s286 = scalar_lea.vmem %s6, %s285
      %p287 = pneg %p202
      %p288 = pneg %p199
      %p289 = scmp.lt.s32.totalorder %s19, 3
      %s290 = scalar_select %p289, %s19, 3
      %s291 = scalar_lea.vmem %s7, %s290
      %s292 = smul.u32 2, %s19
      %p293 = scmp.lt.s32.totalorder %s292, 7
      %s294 = scalar_select %p293, %s292, 7
      %s295 = smul.addr %s294, 8
      %s296 = scalar_lea.vmem %s0, %s295
      %s297 = smul.u32 2, %s19
      %s298 = smul.u32 2, %s19
      %p299 = scmp.lt.s32.totalorder %s298, 7
      %s300 = scalar_select %p299, %s298, 7
      %s301 = smul.addr %s300, 8
      %s302 = scalar_lea.vmem %s1, %s301
      %s303 = smul.u32 2, %s19
      %p304 = scmp.lt.s32.totalorder %s19, 3
      %s305 = scalar_select %p304, %s19, 3
      %s306 = smul.addr %s305, 4
      %s307 = smul.addr %s306, 8
      %s308 = scalar_lea.vmem %s6, %s307
      %p309 = scmp.lt.s32.totalorder %s19, 3
      %s310 = scalar_select %p309, %s19, 3
      %s311 = scalar_lea.vmem %s7, %s310
      %v312 = vld [vmem:[%s296] sm:$0xff]
      %v313 = vld [vmem:[%s296 + $0x8] sm:$0xff]
      %v314 = vld [vmem:[%s302] sm:$0xff]
      %v315 = vld [vmem:[%s302 + $0x8] sm:$0xff]
      %v316 = vld [vmem:[%s2] sm:$0xff]
      %v317 = vld [vmem:[%s2 + $0x8] sm:$0xff]
      %v318 = vld [vmem:[%s2 + $0x10] sm:$0xff]
      %v319 = vld [vmem:[%s2 + $0x18] sm:$0xff]
      %v320 = vld [vmem:[%s3] sm:$0x1]
      %v322 = vlaneseq
      %v323 = vshrl.u32 %v322, 7
      %v324 = vsub.s32 0, %v323
      %v325 = vrot.slane %v320, %v324
      %vm327 = vcmask 261120
      %v329 = vsel %vm327, %v312, 0
      %v332 = vsel %vm327, %v313, 0
      %v335 = vsel %vm327, %v314, 0
      %v338 = vsel %vm327, %v315, 0
      %340 = vmatprep.subr.mxu0 0.0
      %341 = vmatpush1.msra.mxu0 %v316
      %342 = vmatprep.subr.mxu0 0.0
      %343 = vmatpush1.msra.mxu0 %v317
      %344 = vmatprep.subr.mxu0 0.0
      %345 = vmatpush1.msra.mxu0 %v318
      %346 = vmatprep.subr.mxu0 0.0
      %347 = vmatpush1.msra.mxu0 %v319
      %348 = vmatprep.subr.mxu0 0.0
      %349 = vmatpush1.msra.mxu0 0.0
      %350 = vmatprep.subr.mxu0 0.0
      %351 = vmatpush1.msra.mxu0 0.0
      %352 = vmatprep.subr.mxu0 0.0
      %353 = vmatpush1.msra.mxu0 0.0
      %354 = vmatprep.subr.mxu0 0.0
      %355 = vmatpush1.msra.mxu0 0.0
      %356 = vmatprep.subr.mxu0 0.0
      %357 = vmatpush1.msra.mxu0 0.0
      %358 = vmatprep.subr.mxu0 0.0
      %359 = vmatpush1.msra.mxu0 0.0
      %360 = vmatprep.subr.mxu0 0.0
      %361 = vmatpush1.msra.mxu0 0.0
      %362 = vmatprep.subr.mxu0 0.0
      %363 = vmatpush1.msra.mxu0 0.0
      %364 = vmatprep.subr.mxu0 0.0
      %365 = vmatpush1.msra.mxu0 0.0
      %366 = vmatprep.subr.mxu0 0.0
      %367 = vmatpush1.msra.mxu0 0.0
      %368 = vmatprep.subr.mxu0 0.0
      %369 = vmatpush1.msra.mxu0 0.0
      %370 = vmatprep.subr.mxu0 0.0
      %371 = vmatpush1.msra.mxu0 0.0
      %372 = vmatprep.subr.mxu0 0.0
      %373 = vmatpush1.msra.mxu0 0.0
      %374 = vmatprep.subr.mxu0 0.0
      %375 = vmatpush1.msra.mxu0 0.0
      %376 = vmatprep.subr.mxu0 0.0
      %377 = vmatpush1.msra.mxu0 0.0
      %378 = vmatprep.subr.mxu0 0.0
      %379 = vmatpush1.msra.mxu0 0.0
      %380 = vmatprep.subr.mxu0 0.0
      %381 = vmatpush1.msra.mxu0 0.0
      %382 = vmatprep.subr.mxu0 0.0
      %383 = vmatpush1.msra.mxu0 0.0
      %384 = vmatprep.subr.mxu0 0.0
      %385 = vmatpush1.msra.mxu0 0.0
      %386 = vmatprep.subr.mxu0 0.0
      %387 = vmatpush1.msra.mxu0 0.0
      %388 = vmatprep.subr.mxu0 0.0
      %389 = vmatpush1.msra.mxu0 0.0
      %390 = vmatprep.subr.mxu0 0.0
      %391 = vmatpush1.msra.mxu0 0.0
      %392 = vmatprep.subr.mxu0 0.0
      %393 = vmatpush1.msra.mxu0 0.0
      %394 = vmatprep.subr.mxu0 0.0
      %395 = vmatpush1.msra.mxu0 0.0
      %396 = vmatprep.subr.mxu0 0.0
      %397 = vmatpush1.msra.mxu0 0.0
      %398 = vmatprep.subr.mxu0 0.0
      %399 = vmatpush1.msra.mxu0 0.0
      %400 = vmatprep.subr.mxu0 0.0
      %401 = vmatpush1.msra.mxu0 0.0
      %402 = vmatprep.subr.mxu0 0.0
      %403 = vmatpush1.msra.mxu0 0.0
      %404 = vmatprep.mubr.f32.mxu0 0.0
      %405 = vmatmul.mubr.f32.gmra.mrb[0].mxu0 %v329
      %v406 = vpop.f32.mrb[0].mxu0
      %v407 = vadd.f32 %v325, %v406
      %v408 = vpop.f32.mrb[0].mxu0
      %409 = vmatprep.mubr.f32.mxu0 0.0
      %410 = vmatmul.mubr.f32.gmra.mrb[0].mxu0 %v332
      %v411 = vpop.f32.mrb[0].mxu0
      %v412 = vadd.f32 %v325, %v411
      %v413 = vpop.f32.mrb[0].mxu0
      %414 = vmatprep.mubr.f32.mxu0 0.0
      %415 = vmatmul.mubr.f32.gmra.mrb[0].mxu0 %v335
      %v416 = vpop.f32.mrb[0].mxu0
      %v417 = vadd.f32 %v325, %v416
      %v418 = vpop.f32.mrb[0].mxu0
      %419 = vmatprep.mubr.f32.mxu0 0.0
      %420 = vmatmul.mubr.f32.gmra.mrb[0].mxu0 %v338
      %v421 = vpop.f32.mrb[0].mxu0
      %v422 = vadd.f32 %v325, %v421
      %v423 = vpop.f32.mrb[0].mxu0
      %424 = vdwg.mxu0
      %v425 = vmax.f32 %v407, 0.0
      %v426 = vmax.f32 %v412, 0.0
      %v427 = vmax.f32 %v417, 0.0
      %v428 = vmax.f32 %v422, 0.0
      %v429 = vld [vmem:[%s4] sm:$0xff]
      %v430 = vld [vmem:[%s4 + $0x8] sm:$0xff]
      %v431 = vld [vmem:[%s4 + $0x10] sm:$0xff]
      %v432 = vld [vmem:[%s4 + $0x18] sm:$0xff]
      %v433 = vld [vmem:[%s4 + $0x20] sm:$0xff]
      %v434 = vld [vmem:[%s4 + $0x28] sm:$0xff]
      %v435 = vld [vmem:[%s4 + $0x30] sm:$0xff]
      %v436 = vld [vmem:[%s4 + $0x38] sm:$0xff]
      %v437 = vld [vmem:[%s5] sm:$0x1]
      %v439 = vlaneseq
      %v440 = vshrl.u32 %v439, 7
      %v441 = vsub.s32 0, %v440
      %v442 = vrot.slane %v437, %v441
      %vm444 = vcmask 523264
      %v446 = vsel %vm444, %v425, 0
      %v449 = vsel %vm444, %v426, 0
      %v452 = vsel %vm444, %v427, 0
      %v455 = vsel %vm444, %v428, 0
      %457 = vmatprep.subr.mxu0 0.0
      %458 = vmatpush1.msra.mxu0 %v429
      %459 = vmatprep.subr.mxu0 0.0
      %460 = vmatpush1.msra.mxu0 %v430
      %461 = vmatprep.subr.mxu0 0.0
      %462 = vmatpush1.msra.mxu0 %v431
      %463 = vmatprep.subr.mxu0 0.0
      %464 = vmatpush1.msra.mxu0 %v432
      %465 = vmatprep.subr.mxu0 0.0
      %466 = vmatpush1.msra.mxu0 %v433
      %467 = vmatprep.subr.mxu0 0.0
      %468 = vmatpush1.msra.mxu0 %v434
      %469 = vmatprep.subr.mxu0 0.0
      %470 = vmatpush1.msra.mxu0 %v435
      %471 = vmatprep.subr.mxu0 0.0
      %472 = vmatpush1.msra.mxu0 %v436
      %473 = vmatprep.subr.mxu0 0.0
      %474 = vmatpush1.msra.mxu0 0.0
      %475 = vmatprep.subr.mxu0 0.0
      %476 = vmatpush1.msra.mxu0 0.0
      %477 = vmatprep.subr.mxu0 0.0
      %478 = vmatpush1.msra.mxu0 0.0
      %479 = vmatprep.subr.mxu0 0.0
      %480 = vmatpush1.msra.mxu0 0.0
      %481 = vmatprep.subr.mxu0 0.0
      %482 = vmatpush1.msra.mxu0 0.0
      %483 = vmatprep.subr.mxu0 0.0
      %484 = vmatpush1.msra.mxu0 0.0
      %485 = vmatprep.subr.mxu0 0.0
      %486 = vmatpush1.msra.mxu0 0.0
      %487 = vmatprep.subr.mxu0 0.0
      %488 = vmatpush1.msra.mxu0 0.0
      %489 = vmatprep.subr.mxu0 0.0
      %490 = vmatpush1.msra.mxu0 0.0
      %491 = vmatprep.subr.mxu0 0.0
      %492 = vmatpush1.msra.mxu0 0.0
      %493 = vmatprep.subr.mxu0 0.0
      %494 = vmatpush1.msra.mxu0 0.0
      %495 = vmatprep.subr.mxu0 0.0
      %496 = vmatpush1.msra.mxu0 0.0
      %497 = vmatprep.subr.mxu0 0.0
      %498 = vmatpush1.msra.mxu0 0.0
      %499 = vmatprep.subr.mxu0 0.0
      %500 = vmatpush1.msra.mxu0 0.0
      %501 = vmatprep.subr.mxu0 0.0
      %502 = vmatpush1.msra.mxu0 0.0
      %503 = vmatprep.subr.mxu0 0.0
      %504 = vmatpush1.msra.mxu0 0.0
      %505 = vmatprep.subr.mxu0 0.0
      %506 = vmatpush1.msra.mxu0 0.0
      %507 = vmatprep.subr.mxu0 0.0
      %508 = vmatpush1.msra.mxu0 0.0
      %509 = vmatprep.subr.mxu0 0.0
      %510 = vmatpush1.msra.mxu0 0.0
      %511 = vmatprep.subr.mxu0 0.0
      %512 = vmatpush1.msra.mxu0 0.0
      %513 = vmatprep.subr.mxu0 0.0
      %514 = vmatpush1.msra.mxu0 0.0
      %515 = vmatprep.subr.mxu0 0.0
      %516 = vmatpush1.msra.mxu0 0.0
      %517 = vmatprep.subr.mxu0 0.0
      %518 = vmatpush1.msra.mxu0 0.0
      %519 = vmatprep.subr.mxu0 0.0
      %520 = vmatpush1.msra.mxu0 0.0
      %521 = vmatprep.mubr.f32.mxu0 0.0
      %522 = vmatmul.mubr.f32.gmra.mrb[0].mxu0 %v446
      %v523 = vpop.f32.mrb[0].mxu0
      %v524 = vadd.f32 %v442, %v523
      %v525 = vpop.f32.mrb[0].mxu0
      %526 = vmatprep.mubr.f32.mxu0 0.0
      %527 = vmatmul.mubr.f32.gmra.mrb[0].mxu0 %v449
      %v528 = vpop.f32.mrb[0].mxu0
      %v529 = vadd.f32 %v442, %v528
      %v530 = vpop.f32.mrb[0].mxu0
      %531 = vmatprep.mubr.f32.mxu0 0.0
      %532 = vmatmul.mubr.f32.gmra.mrb[0].mxu0 %v452
      %v533 = vpop.f32.mrb[0].mxu0
      %v534 = vadd.f32 %v442, %v533
      %v535 = vpop.f32.mrb[0].mxu0
      %536 = vmatprep.mubr.f32.mxu0 0.0
      %537 = vmatmul.mubr.f32.gmra.mrb[0].mxu0 %v455
      %v538 = vpop.f32.mrb[0].mxu0
      %v539 = vadd.f32 %v442, %v538
      %v540 = vpop.f32.mrb[0].mxu0
      %541 = vdwg.mxu0
      %544 = vrot.lane.b32.xlu0 %v534, 16
      %v545 = vpop.permute.xlu0 %544
      %546 = vrot.lane.b32.xlu0 %v539, 16
      %v547 = vpop.permute.xlu0 %546
      %vm550 = vcmask 130048
      %v551 = vsel %vm550, %v524, %v545
      %v552 = vsel %vm550, %v529, %v547
      %v553 = vlaneseq
      %v554 = vshrl.u32 %v553, 7
      %v555 = vadd.s32 %v554, 8
      %s556 = smul.u32 %s19, 16
      %v557 = vstv %s556
      %v558 = vadd.s32 %v554, %v557
      %v559 = vadd.s32 %v555, %v557
      %vm560 = vcmp.lt.s32.totalorder %v558, 50
      %vm561 = vcmp.lt.s32.totalorder %v559, 50
      %v562 = vsel %vm560, 1, 0
      %v563 = vsel %vm561, 1, 0
      %v564 = vcvt.s32.f32 %v562
      %v565 = vcvt.s32.f32 %v563
      %v566 = vmul.f32 %v551, %v564
      %v567 = vmul.f32 %v552, %v565
      %568 = vxpose.xlu0.b32.start [1/16] %v566, 128
      %569 = vxpose.xlu0.b32.cont [2/16] %v567, 128
      %570 = vxpose.xlu0.b32.cont [3/16] 0.0, 128
      %571 = vxpose.xlu0.b32.cont [4/16] 0.0, 128
      %572 = vxpose.xlu0.b32.cont [5/16] 0.0, 128
      %573 = vxpose.xlu0.b32.cont [6/16] 0.0, 128
      %574 = vxpose.xlu0.b32.cont [7/16] 0.0, 128
      %575 = vxpose.xlu0.b32.cont [8/16] 0.0, 128
      %576 = vxpose.xlu0.b32.cont [9/16] 0.0, 128
      %577 = vxpose.xlu0.b32.cont [10/16] 0.0, 128
      %578 = vxpose.xlu0.b32.cont [11/16] 0.0, 128
      %579 = vxpose.xlu0.b32.cont [12/16] 0.0, 128
      %580 = vxpose.xlu0.b32.cont [13/16] 0.0, 128
      %581 = vxpose.xlu0.b32.cont [14/16] 0.0, 128
      %582 = vxpose.xlu0.b32.cont [15/16] 0.0, 128
      %583 = vxpose.xlu0.b32.end [16/16] 0.0, 128
      %v584 = vpop.trf.xlu0
      %v585 = vpop.trf.xlu0
      %v586 = vpop.trf.xlu0
      %v587 = vpop.trf.xlu0
      %v588 = vpop.trf.xlu0
      %v589 = vpop.trf.xlu0
      %v590 = vpop.trf.xlu0
      %v591 = vpop.trf.xlu0
      %v592 = vpop.trf.xlu0
      %v593 = vpop.trf.xlu0
      %v594 = vpop.trf.xlu0
      %v595 = vpop.trf.xlu0
      %v596 = vpop.trf.xlu0
      %v597 = vpop.trf.xlu0
      %v598 = vpop.trf.xlu0
      %v599 = vpop.trf.xlu0
      %v601 = vsel %vm550, %v584, 0
      %v604 = vsel %vm550, %v585, 0
      %v607 = vsel %vm550, %v586, 0
      %v610 = vsel %vm550, %v587, 0
      %612 = vmatprep.subr.mxu0 0.0
      %613 = vmatpush1.msra.mxu0 %v566
      %614 = vmatprep.subr.mxu0 0.0
      %615 = vmatpush1.msra.mxu0 %v567
      %616 = vmatprep.subr.mxu0 0.0
      %617 = vmatpush1.msra.mxu0 0.0
      %618 = vmatprep.subr.mxu0 0.0
      %619 = vmatpush1.msra.mxu0 0.0
      %620 = vmatprep.subr.mxu0 0.0
      %621 = vmatpush1.msra.mxu0 0.0
      %622 = vmatprep.subr.mxu0 0.0
      %623 = vmatpush1.msra.mxu0 0.0
      %624 = vmatprep.subr.mxu0 0.0
      %625 = vmatpush1.msra.mxu0 0.0
      %626 = vmatprep.subr.mxu0 0.0
      %627 = vmatpush1.msra.mxu0 0.0
      %628 = vmatprep.subr.mxu0 0.0
      %629 = vmatpush1.msra.mxu0 0.0
      %630 = vmatprep.subr.mxu0 0.0
      %631 = vmatpush1.msra.mxu0 0.0
      %632 = vmatprep.subr.mxu0 0.0
      %633 = vmatpush1.msra.mxu0 0.0
      %634 = vmatprep.subr.mxu0 0.0
      %635 = vmatpush1.msra.mxu0 0.0
      %636 = vmatprep.subr.mxu0 0.0
      %637 = vmatpush1.msra.mxu0 0.0
      %638 = vmatprep.subr.mxu0 0.0
      %639 = vmatpush1.msra.mxu0 0.0
      %640 = vmatprep.subr.mxu0 0.0
      %641 = vmatpush1.msra.mxu0 0.0
      %642 = vmatprep.subr.mxu0 0.0
      %643 = vmatpush1.msra.mxu0 0.0
      %644 = vmatprep.subr.mxu0 0.0
      %645 = vmatpush1.msra.mxu0 0.0
      %646 = vmatprep.subr.mxu0 0.0
      %647 = vmatpush1.msra.mxu0 0.0
      %648 = vmatprep.subr.mxu0 0.0
      %649 = vmatpush1.msra.mxu0 0.0
      %650 = vmatprep.subr.mxu0 0.0
      %651 = vmatpush1.msra.mxu0 0.0
      %652 = vmatprep.subr.mxu0 0.0
      %653 = vmatpush1.msra.mxu0 0.0
      %654 = vmatprep.subr.mxu0 0.0
      %655 = vmatpush1.msra.mxu0 0.0
      %656 = vmatprep.subr.mxu0 0.0
      %657 = vmatpush1.msra.mxu0 0.0
      %658 = vmatprep.subr.mxu0 0.0
      %659 = vmatpush1.msra.mxu0 0.0
      %660 = vmatprep.subr.mxu0 0.0
      %661 = vmatpush1.msra.mxu0 0.0
      %662 = vmatprep.subr.mxu0 0.0
      %663 = vmatpush1.msra.mxu0 0.0
      %664 = vmatprep.subr.mxu0 0.0
      %665 = vmatpush1.msra.mxu0 0.0
      %666 = vmatprep.subr.mxu0 0.0
      %667 = vmatpush1.msra.mxu0 0.0
      %668 = vmatprep.subr.mxu0 0.0
      %669 = vmatpush1.msra.mxu0 0.0
      %670 = vmatprep.subr.mxu0 0.0
      %671 = vmatpush1.msra.mxu0 0.0
      %672 = vmatprep.subr.mxu0 0.0
      %673 = vmatpush1.msra.mxu0 0.0
      %674 = vmatprep.subr.mxu0 0.0
      %675 = vmatpush1.msra.mxu0 0.0
      %676 = vmatprep.mubr.f32.mxu0 0.0
      %677 = vmatmul.mubr.f32.gmra.mrb[0].mxu0 %v601
      %v678 = vpop.f32.mrb[0].mxu0
      %v679 = vadd.f32 0.0, %v678
      %v680 = vpop.f32.mrb[0].mxu0
      %681 = vmatprep.mubr.f32.mxu0 0.0
      %682 = vmatmul.mubr.f32.gmra.mrb[0].mxu0 %v604
      %v683 = vpop.f32.mrb[0].mxu0
      %v684 = vadd.f32 0.0, %v683
      %v685 = vpop.f32.mrb[0].mxu0
      %686 = vmatprep.mubr.f32.mxu0 0.0
      %687 = vmatmul.mubr.f32.gmra.mrb[0].mxu0 %v607
      %v688 = vpop.f32.mrb[0].mxu0
      %v689 = vadd.f32 0.0, %v688
      %v690 = vpop.f32.mrb[0].mxu0
      %691 = vmatprep.mubr.f32.mxu0 0.0
      %692 = vmatmul.mubr.f32.gmra.mrb[0].mxu0 %v610
      %v693 = vpop.f32.mrb[0].mxu0
      %v694 = vadd.f32 0.0, %v693
      %v695 = vpop.f32.mrb[0].mxu0
      %696 = vdwg.mxu0
      %697 = vst.msk [vmem:[%s308] sm:$0xff] %vm327, %v679
      %698 = vst.msk [vmem:[%s308 + $0x8] sm:$0xff] %vm327, %v684
      %699 = vst.msk [vmem:[%s308 + $0x10] sm:$0xff] %vm327, %v689
      %700 = vst.msk [vmem:[%s308 + $0x18] sm:$0xff] %vm327, %v694
      %v701 = vsel %vm327, %v566, 0.0
      %v702 = vsel %vm327, %v567, 0.0
      %v703 = vadd.f32 %v701, %v702
      %v704 = vrot.slane %v703, 4
      %v705 = vadd.f32 %v703, %v704
      %v706 = vrot.slane %v705, 2
      %v707 = vadd.f32 %v705, %v706
      %v708 = vrot.slane %v707, 1
      %v709 = vadd.f32 %v707, %v708
      %vm710 = vcmask 253952
      %711 = vst.msk [vmem:[%s311] sm:$0x1] %vm710, %v709
      %p712 = scmp.lt.s32.totalorder %s19, 3
      %s713 = scalar_select %p712, %s19, 3
      %s714 = smul.addr %s713, 4
      %s715 = smul.addr %s714, 8
      %s716 = scalar_lea.vmem %s6, %s715
      %p717 = scmp.lt.s32.totalorder %s19, 3
      %s718 = scalar_select %p717, %s19, 3
      %s719 = scalar_lea.vmem %s7, %s718
      // Predicated region
      $region45: #{deep_cka.1} parent=43 // pred_check
        %p720 = pneg %p173
      $region46: #{deep_cka.1} parent=43 // pred_check_branch
        %722 = sbr.rel (%p720) target = $region48
      $region47: #{deep_cka.1} parent=43 // pred_region
        _
      $region48: #{deep_cka.1} parent=43 // pred_fallthru
        _
      // Predicated region
      $region49: #{deep_cka.1} parent=43 // pred_check
        %p723 = pneg %p199
      $region50: #{deep_cka.1} parent=43 // pred_check_branch
        %725 = sbr.rel (%p723) target = $region52
      $region51: #{deep_cka.1} parent=43 // pred_region
        _
      $region52: #{deep_cka.1} parent=43 // pred_fallthru
        _
    $region44: #{deep_cka.1} parent=5 // pred_fallthru
      _
    %p726 = scmp.le.s32.totalorder 2, %s14
    // Predicated region
    $region53: #{deep_cka.1} parent=5 // pred_check
      %p727 = pneg %p726
    $region54: #{deep_cka.1} parent=5 // pred_check_branch
      %729 = sbr.rel (%p727) target = $region56
    $region55: #{deep_cka.1} parent=5 // pred_region
      %s730 = ssub.s32 %s14, 2
      // Predicated region
      $region57: #{deep_cka.1} parent=55 // pred_check
        %p731 = pneg %p179
      $region58: #{deep_cka.1} parent=55 // pred_check_branch
        %733 = sbr.rel (%p731) target = $region60
      $region59: #{deep_cka.1} parent=55 // pred_region
        %p734 = scmp.lt.s32.totalorder %s20, 3
        %s735 = scalar_select %p734, %s20, 3
        %s736 = smul.addr %s735, 4
        %s737 = smul.addr %s736, 8
        %s738 = scalar_lea.vmem %s6, %s737
      $region60: #{deep_cka.1} parent=55 // pred_fallthru
        _
      // Predicated region
      $region61: #{deep_cka.1} parent=55 // pred_check
        %p739 = pneg %p205
      $region62: #{deep_cka.1} parent=55 // pred_check_branch
        %741 = sbr.rel (%p739) target = $region64
      $region63: #{deep_cka.1} parent=55 // pred_region
        %p742 = scmp.lt.s32.totalorder %s20, 3
        %s743 = scalar_select %p742, %s20, 3
        %s744 = scalar_lea.vmem %s7, %s743
      $region64: #{deep_cka.1} parent=55 // pred_fallthru
        _
    $region56: #{deep_cka.1} parent=5 // pred_fallthru
      _
  $region6: #{deep_cka.1} parent=0 // loop_footer
    %s18 = sadd.s32 1, %s14
  $region7: #{deep_cka.1} parent=0 // loop_footer_branch
    %13 = sbr.rel target = $region3
  $region8: #{deep_cka.1} parent=0 // loop_exit
    _

</llo_original>
